<compile_context>
chip_gen: v7x
topology: tpu7x:2x2x1
jax: 0.10.0
libtpu: 0.0.40
codegen_flags: <defaults>
</compile_context>

<pallas_src>
import jax
import jax.numpy as jnp
from jax.experimental import pallas as pl
from jax.experimental.pallas import tpu as pltpu

LANE = 128   # padded feature width (H, H//2, C_IN all live on 128 lanes)


def _round_up(n, m):
    return ((n + m - 1) // m) * m


# ---------------------------------------------------------------------------
# Pallas kernel: one graph-shard per grid step.
#   a_ref : [NP, NP]      bf16  normalized adjacency of this shard (zero-padded)
#   x_ref : [NP, 128]     bf16  node features (C_IN real cols, rest zero)
#   w_ref : [3, 128, 128] bf16  W0 | W1 | (W2 @ Wr0)      (zero-padded)
#   b_ref : [8, 128]      f32   b0 | b1 | (b2@Wr0 + br0) | wr1^T row | br1 bcast | 0...
#   s_ref : [GP, NP]      bf16  segment-mean matrix (rows sum to 1)
#   out_ref: [GP, 128]    f32   per-graph score broadcast across lanes
# ---------------------------------------------------------------------------
def petri_gcn_kernel(a_ref, x_ref, w_ref, b_ref, s_ref, out_ref):
    a = a_ref[...]                                              # bf16 [NP, NP]

    # --- GCN layer 0: relu(A @ (X W0) + b0) ----------------------------------
    h = jnp.dot(x_ref[...], w_ref[0], preferred_element_type=jnp.float32)
    h = jnp.dot(a, h.astype(jnp.bfloat16), preferred_element_type=jnp.float32)
    h = jnp.maximum(h + b_ref[0:1, :], 0.0)

    # --- GCN layer 1: relu(A @ (h W1) + b1) ----------------------------------
    h = jnp.dot(h.astype(jnp.bfloat16), w_ref[1], preferred_element_type=jnp.float32)
    h = jnp.dot(a, h.astype(jnp.bfloat16), preferred_element_type=jnp.float32)
    h = jnp.maximum(h + b_ref[1:2, :], 0.0)

    # --- GCN layer 2 fused with readout first linear (W2·Wr0 fold, no ReLU on
    #     layer 2 itself):  z = relu( A @ (h (W2·Wr0)) + (b2·Wr0 + br0) ) ------
    h = jnp.dot(h.astype(jnp.bfloat16), w_ref[2], preferred_element_type=jnp.float32)
    h = jnp.dot(a, h.astype(jnp.bfloat16), preferred_element_type=jnp.float32)
    z = jnp.maximum(h + b_ref[2:3, :], 0.0)                     # f32 [NP, 128]

    # --- Pool FIRST (segment mean), then tiny projection on VPU + lane reduce.
    #     out = (S @ z) · wr1 + br1  ==  S @ (z · wr1 + br1)  since S rows sum to 1.
    pooled = jnp.dot(s_ref[...], z.astype(jnp.bfloat16),
                     preferred_element_type=jnp.float32)        # f32 [GP, 128]
    scores = jnp.sum(pooled * b_ref[3:4, :], axis=1, keepdims=True)  # [GP, 1]

    # Lane-dense store: broadcast the per-graph scalar across 128 lanes, add br1.
    out_ref[...] = jnp.broadcast_to(scores, out_ref.shape) + b_ref[4:5, :]


def _vmem_limit_bytes(a_stack, x_stack, w_stack, b_stack, s_stack, gp):
    """Explicit VMEM budget, clamped under v7x's 64 MiB physical VMEM."""
    npad = a_stack.shape[1]
    per_step_io = 2 * (a_stack[0].nbytes + x_stack[0].nbytes + s_stack[0].nbytes
                       + gp * LANE * 4)                    # double-buffered grid I/O
    resident = w_stack.nbytes + b_stack.nbytes             # same block every step
    f32_interm = (3 * npad * LANE + 2 * gp * LANE) * 4     # h / z / pooled temporaries
    budget = per_step_io + resident + f32_interm + (4 << 20)
    return int(min(max(budget, 32 << 20), 60 << 20))


def petri_gcn_forward(a_stack, x_stack, w_stack, b_stack, s_stack, num_graphs):
    """Run the fused kernel over B independent graph shards (parallel grid axis)."""
    bsz, npad, _ = a_stack.shape
    gp = s_stack.shape[1]
    out = pl.pallas_call(
        petri_gcn_kernel,
        out_shape=jax.ShapeDtypeStruct((bsz, gp, LANE), jnp.float32),
        grid=(bsz,),
        in_specs=[
            pl.BlockSpec((None, npad, npad), lambda b: (b, 0, 0)),   # A_hat (per shard)
            pl.BlockSpec((None, npad, LANE), lambda b: (b, 0, 0)),   # X     (per shard)
            pl.BlockSpec((w_stack.shape[0], LANE, LANE), lambda b: (0, 0, 0)),  # weights (resident)
            pl.BlockSpec((b_stack.shape[0], LANE), lambda b: (0, 0)),           # biases  (resident)
            pl.BlockSpec((None, gp, npad), lambda b: (b, 0, 0)),     # S     (per shard)
        ],
        out_specs=pl.BlockSpec((None, gp, LANE), lambda b: (b, 0, 0)),
        compiler_params=pltpu.CompilerParams(
            dimension_semantics=("parallel",),
            vmem_limit_bytes=_vmem_limit_bytes(a_stack, x_stack, w_stack,
                                               b_stack, s_stack, gp),
        ),
    )(a_stack, x_stack, w_stack, b_stack, s_stack)
    return out[:, :num_graphs, :1]                            # [B, G, 1] f32


# ---------------------------------------------------------------------------
# Glue: GCNConv normalization (dense), segment-mean matrix, padding + packing.
# ---------------------------------------------------------------------------
def build_normalized_adjacency(edge_index, edge_weight, num_nodes):
    """Dense A_hat = D^{-1/2} (A + I) D^{-1/2}, with A[dst, src] = edge_weight."""
    src, dst = edge_index[0], edge_index[1]
    adj = jnp.zeros((num_nodes, num_nodes), jnp.float32)
    adj = adj.at[dst, src].add(edge_weight.astype(jnp.float32))
    adj = adj + jnp.eye(num_nodes, dtype=jnp.float32)        # self loops, weight 1
    deg = adj.sum(axis=1)                                     # weighted degree incl. self loop
    deg_inv_sqrt = jnp.where(deg > 0, jax.lax.rsqrt(deg), 0.0)
    return deg_inv_sqrt[:, None] * adj * deg_inv_sqrt[None, :]


def build_segment_mean_matrix(batch, num_graphs):
    onehot = (batch[None, :] == jnp.arange(num_graphs)[:, None]).astype(jnp.float32)
    counts = onehot.sum(axis=1, keepdims=True)
    return onehot / jnp.maximum(counts, 1.0)


def init_params(key, in_channels, hidden_channels):
    """Deterministic synthetic parameters (shapes from Petri_GCN.__init__)."""
    ks = jax.random.split(key, 10)
    h, h2 = hidden_channels, hidden_channels // 2
    scale = 0.1
    w0 = scale * jax.random.normal(ks[0], (in_channels, h), jnp.float32)
    b0 = scale * jax.random.normal(ks[1], (1, h), jnp.float32)
    w1 = scale * jax.random.normal(ks[2], (h, h), jnp.float32)
    b1 = scale * jax.random.normal(ks[3], (1, h), jnp.float32)
    w2 = scale * jax.random.normal(ks[4], (h, h), jnp.float32)
    b2 = scale * jax.random.normal(ks[5], (1, h), jnp.float32)
    wr0 = scale * jax.random.normal(ks[6], (h, h2), jnp.float32)
    br0 = scale * jax.random.normal(ks[7], (1, h2), jnp.float32)
    wr1 = scale * jax.random.normal(ks[8], (h2, 1), jnp.float32)
    br1 = scale * jax.random.normal(ks[9], (1, 1), jnp.float32)
    return (w0, b0, w1, b1, w2, b2, wr0, br0, wr1, br1)
    # TODO(synk): torch_geometric.nn.MLP defaults may add batch_norm between
    # readout linears; plain Linear->ReLU->Linear is implemented here.


def _pad2(m, rows, cols):
    out = jnp.zeros((rows, cols), jnp.float32)
    return out.at[:m.shape[0], :m.shape[1]].set(m.astype(jnp.float32))


def pack_inputs(a_hats, xs, seg_mats, params):
    """Pad to sublane/lane-friendly shapes, fold W2·Wr0, and pack params."""
    (w0, b0, w1, b1, w2, b2, wr0, br0, wr1, br1) = params
    n = max(a.shape[0] for a in a_hats)
    g = max(s.shape[0] for s in seg_mats)
    npad = _round_up(n, 8)
    gp = _round_up(max(g, 8), 8)

    a_stack = jnp.stack([_pad2(a, npad, npad) for a in a_hats]).astype(jnp.bfloat16)
    x_stack = jnp.stack([_pad2(x, npad, LANE) for x in xs]).astype(jnp.bfloat16)
    s_stack = jnp.stack([_pad2(s, gp, npad) for s in seg_mats]).astype(jnp.bfloat16)

    # Fold the readout's first linear into the last (ReLU-free) GCN layer:
    #   A@(h@W2)@Wr0 + b2@Wr0 + br0  ==  A@(h@(W2·Wr0)) + (b2·Wr0 + br0)
    w_fold = w2 @ wr0                                          # [H, H/2] f32
    b_fold = b2 @ wr0 + br0                                    # [1, H/2] f32

    w_stack = jnp.stack([
        _pad2(w0, LANE, LANE),
        _pad2(w1, LANE, LANE),
        _pad2(w_fold, LANE, LANE),
    ]).astype(jnp.bfloat16)                                    # [3, 128, 128]

    b_stack = jnp.zeros((8, LANE), jnp.float32)
    b_stack = b_stack.at[0, :b0.shape[1]].set(b0[0])
    b_stack = b_stack.at[1, :b1.shape[1]].set(b1[0])
    b_stack = b_stack.at[2, :b_fold.shape[1]].set(b_fold[0])
    b_stack = b_stack.at[3, :wr1.shape[0]].set(wr1[:, 0])      # wr1 as a lane row
    b_stack = b_stack.at[4, :].set(br1[0, 0])                  # br1 broadcast
    return a_stack, x_stack, w_stack, b_stack, s_stack


def reference_forward(a_hat, x, params, seg_mat):
    """Pure-JAX f32 reference in the original op order (project, then pool)."""
    (w0, b0, w1, b1, w2, b2, wr0, br0, wr1, br1) = params
    h = jnp.maximum(a_hat @ (x @ w0) + b0, 0.0)
    h = jnp.maximum(a_hat @ (h @ w1) + b1, 0.0)
    h = a_hat @ (h @ w2) + b2
    z = jnp.maximum(h @ wr0 + br0, 0.0)
    y = z @ wr1 + br1
    return seg_mat @ y                                         # [G, 1]


if __name__ == "__main__":
    key = jax.random.PRNGKey(0)
    k_p, *shard_keys = jax.random.split(key, 1 + 2 * 3)

    # Two independent graph shards (PyG graphs are disconnected, so splitting a
    # batch at graph boundaries is exact) -> parallel grid axis, one per TC on v7x.
    # Per shard: 16 nodes, 2 graphs (8 nodes each), 4 input features, 32 hidden,
    # 3 GCN layers, 40 random weighted edges.
    B = 2
    N_SHARD, C_IN, H, G_SHARD, E = 16, 4, 32, 2, 40

    params = init_params(k_p, C_IN, H)

    a_hats, xs, seg_mats = [], [], []
    for s in range(B):
        kx, kei, kew = shard_keys[3 * s: 3 * s + 3]
        x = jax.random.normal(kx, (N_SHARD, C_IN), jnp.float32)
        edge_index = jax.random.randint(kei, (2, E), 0, N_SHARD, dtype=jnp.int32)
        edge_attr = jax.random.uniform(kew, (E,), jnp.float32, 0.1, 1.0)
        batch = jnp.concatenate([jnp.zeros(N_SHARD // 2, jnp.int32),
                                 jnp.ones(N_SHARD - N_SHARD // 2, jnp.int32)])
        a_hats.append(build_normalized_adjacency(edge_index, edge_attr, N_SHARD))
        xs.append(x)
        seg_mats.append(build_segment_mean_matrix(batch, G_SHARD))

    a_stack, x_stack, w_stack, b_stack, s_stack = pack_inputs(a_hats, xs, seg_mats, params)
    out = petri_gcn_forward(a_stack, x_stack, w_stack, b_stack, s_stack,
                            num_graphs=G_SHARD)
    out = jax.block_until_ready(out)                           # [B, G, 1] f32

    assert out.shape == (B, G_SHARD, 1) and out.dtype == jnp.float32

    # f32 reference (original op order); bf16 MXU operands => loose tolerance.
    ref = jnp.stack([reference_forward(a_hats[s], xs[s], params, seg_mats[s])
                     for s in range(B)])
    assert jnp.allclose(out, ref, atol=3e-2, rtol=3e-2)

    print("KERNEL_OK")
</pallas_src>

<mosaic_0001>
module attributes {stable_mosaic.version = 11 : i64} {
  func.func @petri_gcn_kernel(%arg0: i32, %arg1: memref<1x16x16xbf16, #tpu.memory_space<vmem>>, %arg2: memref<1x16x128xbf16, #tpu.memory_space<vmem>>, %arg3: memref<3x128x128xbf16, #tpu.memory_space<vmem>>, %arg4: memref<8x128xf32, #tpu.memory_space<vmem>>, %arg5: memref<1x8x16xbf16, #tpu.memory_space<vmem>>, %arg6: memref<1x8x128xf32, #tpu.memory_space<vmem>>) attributes {dimension_semantics = [#tpu.dimension_semantics<parallel>], iteration_bounds = array<i64: 2>, scalar_prefetch = 0 : i64, scratch_operands = 0 : i64, tpu.core_type = #tpu.core_type<tc>, window_params = [{transform_indices = @transform_0, window_bounds = array<i64: 1, 16, 16>}, {transform_indices = @transform_1, window_bounds = array<i64: 1, 16, 128>}, {pipeline_mode = #tpu.pipeline_mode<synchronous>, transform_indices = @transform_2, window_bounds = array<i64: 3, 128, 128>}, {pipeline_mode = #tpu.pipeline_mode<synchronous>, transform_indices = @transform_3, window_bounds = array<i64: 8, 128>}, {transform_indices = @transform_4, window_bounds = array<i64: 1, 8, 16>}, {transform_indices = @transform_5, window_bounds = array<i64: 1, 8, 128>}]} {
    %c0 = arith.constant 0 : index
    %c0_0 = arith.constant 0 : index
    %c0_1 = arith.constant 0 : index
    %0 = vector.load %arg1[%c0, %c0_0, %c0_1] : memref<1x16x16xbf16, #tpu.memory_space<vmem>>, vector<1x16x16xbf16>
    %1 = vector.shape_cast %0 : vector<1x16x16xbf16> to vector<16x16xbf16>
    %c0_2 = arith.constant 0 : index
    %c0_3 = arith.constant 0 : index
    %c0_4 = arith.constant 0 : index
    %2 = vector.load %arg2[%c0_2, %c0_3, %c0_4] : memref<1x16x128xbf16, #tpu.memory_space<vmem>>, vector<1x16x128xbf16>
    %3 = vector.shape_cast %2 : vector<1x16x128xbf16> to vector<16x128xbf16>
    %c0_5 = arith.constant 0 : index
    %c0_6 = arith.constant 0 : index
    %c0_7 = arith.constant 0 : index
    %4 = vector.load %arg3[%c0_5, %c0_6, %c0_7] : memref<3x128x128xbf16, #tpu.memory_space<vmem>>, vector<1x128x128xbf16>
    %5 = vector.shape_cast %4 : vector<1x128x128xbf16> to vector<128x128xbf16>
    %cst = arith.constant dense<0.000000e+00> : vector<16x128xf32>
    %6 = tpu.matmul %3, %5, %cst {dimension_numbers = #tpu.dot_dimension_numbers<[1], [0], [0], [1], [0, 0, 1, 1], [], []>} : vector<16x128xbf16>, vector<128x128xbf16>, vector<16x128xf32> -> vector<16x128xf32>
    %7 = arith.truncf %6 : vector<16x128xf32> to vector<16x128xbf16>
    %cst_8 = arith.constant dense<0.000000e+00> : vector<16x128xf32>
    %8 = tpu.matmul %1, %7, %cst_8 {dimension_numbers = #tpu.dot_dimension_numbers<[1], [0], [0], [1], [0, 0, 1, 1], [], []>} : vector<16x16xbf16>, vector<16x128xbf16>, vector<16x128xf32> -> vector<16x128xf32>
    %c0_9 = arith.constant 0 : index
    %c0_10 = arith.constant 0 : index
    %9 = vector.load %arg4[%c0_9, %c0_10] : memref<8x128xf32, #tpu.memory_space<vmem>>, vector<1x128xf32>
    %10 = vector.broadcast %9 : vector<1x128xf32> to vector<16x128xf32>
    %11 = arith.addf %8, %10 : vector<16x128xf32>
    %cst_11 = arith.constant 0.000000e+00 : f32
    %12 = vector.broadcast %cst_11 : f32 to vector<16x128xf32>
    %13 = arith.maximumf %11, %12 : vector<16x128xf32>
    %14 = arith.truncf %13 : vector<16x128xf32> to vector<16x128xbf16>
    %c1 = arith.constant 1 : index
    %c0_12 = arith.constant 0 : index
    %c0_13 = arith.constant 0 : index
    %15 = vector.load %arg3[%c1, %c0_12, %c0_13] : memref<3x128x128xbf16, #tpu.memory_space<vmem>>, vector<1x128x128xbf16>
    %16 = vector.shape_cast %15 : vector<1x128x128xbf16> to vector<128x128xbf16>
    %cst_14 = arith.constant dense<0.000000e+00> : vector<16x128xf32>
    %17 = tpu.matmul %14, %16, %cst_14 {dimension_numbers = #tpu.dot_dimension_numbers<[1], [0], [0], [1], [0, 0, 1, 1], [], []>} : vector<16x128xbf16>, vector<128x128xbf16>, vector<16x128xf32> -> vector<16x128xf32>
    %18 = arith.truncf %17 : vector<16x128xf32> to vector<16x128xbf16>
    %cst_15 = arith.constant dense<0.000000e+00> : vector<16x128xf32>
    %19 = tpu.matmul %1, %18, %cst_15 {dimension_numbers = #tpu.dot_dimension_numbers<[1], [0], [0], [1], [0, 0, 1, 1], [], []>} : vector<16x16xbf16>, vector<16x128xbf16>, vector<16x128xf32> -> vector<16x128xf32>
    %c1_16 = arith.constant 1 : index
    %c0_17 = arith.constant 0 : index
    %20 = vector.load %arg4[%c1_16, %c0_17] : memref<8x128xf32, #tpu.memory_space<vmem>>, vector<1x128xf32>
    %21 = vector.broadcast %20 : vector<1x128xf32> to vector<16x128xf32>
    %22 = arith.addf %19, %21 : vector<16x128xf32>
    %cst_18 = arith.constant 0.000000e+00 : f32
    %23 = vector.broadcast %cst_18 : f32 to vector<16x128xf32>
    %24 = arith.maximumf %22, %23 : vector<16x128xf32>
    %25 = arith.truncf %24 : vector<16x128xf32> to vector<16x128xbf16>
    %c2 = arith.constant 2 : index
    %c0_19 = arith.constant 0 : index
    %c0_20 = arith.constant 0 : index
    %26 = vector.load %arg3[%c2, %c0_19, %c0_20] : memref<3x128x128xbf16, #tpu.memory_space<vmem>>, vector<1x128x128xbf16>
    %27 = vector.shape_cast %26 : vector<1x128x128xbf16> to vector<128x128xbf16>
    %cst_21 = arith.constant dense<0.000000e+00> : vector<16x128xf32>
    %28 = tpu.matmul %25, %27, %cst_21 {dimension_numbers = #tpu.dot_dimension_numbers<[1], [0], [0], [1], [0, 0, 1, 1], [], []>} : vector<16x128xbf16>, vector<128x128xbf16>, vector<16x128xf32> -> vector<16x128xf32>
    %29 = arith.truncf %28 : vector<16x128xf32> to vector<16x128xbf16>
    %cst_22 = arith.constant dense<0.000000e+00> : vector<16x128xf32>
    %30 = tpu.matmul %1, %29, %cst_22 {dimension_numbers = #tpu.dot_dimension_numbers<[1], [0], [0], [1], [0, 0, 1, 1], [], []>} : vector<16x16xbf16>, vector<16x128xbf16>, vector<16x128xf32> -> vector<16x128xf32>
    %c2_23 = arith.constant 2 : index
    %c0_24 = arith.constant 0 : index
    %31 = vector.load %arg4[%c2_23, %c0_24] : memref<8x128xf32, #tpu.memory_space<vmem>>, vector<1x128xf32>
    %32 = vector.broadcast %31 : vector<1x128xf32> to vector<16x128xf32>
    %33 = arith.addf %30, %32 : vector<16x128xf32>
    %cst_25 = arith.constant 0.000000e+00 : f32
    %34 = vector.broadcast %cst_25 : f32 to vector<16x128xf32>
    %35 = arith.maximumf %33, %34 : vector<16x128xf32>
    %c0_26 = arith.constant 0 : index
    %c0_27 = arith.constant 0 : index
    %c0_28 = arith.constant 0 : index
    %36 = vector.load %arg5[%c0_26, %c0_27, %c0_28] : memref<1x8x16xbf16, #tpu.memory_space<vmem>>, vector<1x8x16xbf16>
    %37 = vector.shape_cast %36 : vector<1x8x16xbf16> to vector<8x16xbf16>
    %38 = arith.truncf %35 : vector<16x128xf32> to vector<16x128xbf16>
    %cst_29 = arith.constant dense<0.000000e+00> : vector<8x128xf32>
    %39 = tpu.matmul %37, %38, %cst_29 {dimension_numbers = #tpu.dot_dimension_numbers<[1], [0], [0], [1], [0, 0, 1, 1], [], []>} : vector<8x16xbf16>, vector<16x128xbf16>, vector<8x128xf32> -> vector<8x128xf32>
    %c3 = arith.constant 3 : index
    %c0_30 = arith.constant 0 : index
    %40 = vector.load %arg4[%c3, %c0_30] : memref<8x128xf32, #tpu.memory_space<vmem>>, vector<1x128xf32>
    %41 = vector.broadcast %40 : vector<1x128xf32> to vector<8x128xf32>
    %42 = arith.mulf %39, %41 : vector<8x128xf32>
    %cst_31 = arith.constant dense<0.000000e+00> : vector<8xf32>
    %43 = vector.multi_reduction <add>, %42, %cst_31 [1] : vector<8x128xf32> to vector<8xf32>
    %44 = vector.shape_cast %43 : vector<8xf32> to vector<8x1xf32>
    %45 = vector.shape_cast %44 : vector<8x1xf32> to vector<8x1xf32>
    %46 = vector.broadcast %45 : vector<8x1xf32> to vector<8x128xf32>
    %c4 = arith.constant 4 : index
    %c0_32 = arith.constant 0 : index
    %47 = vector.load %arg4[%c4, %c0_32] : memref<8x128xf32, #tpu.memory_space<vmem>>, vector<1x128xf32>
    %48 = vector.broadcast %47 : vector<1x128xf32> to vector<8x128xf32>
    %49 = arith.addf %46, %48 : vector<8x128xf32>
    %c0_33 = arith.constant 0 : index
    %c0_34 = arith.constant 0 : index
    %c0_35 = arith.constant 0 : index
    %50 = vector.load %arg6[%c0_33, %c0_34, %c0_35] : memref<1x8x128xf32, #tpu.memory_space<vmem>>, vector<1x8x128xf32>
    %51 = vector.shape_cast %50 : vector<1x8x128xf32> to vector<8x128xf32>
    %52 = vector.shape_cast %49 : vector<8x128xf32> to vector<1x8x128xf32>
    tpu.vector_store %arg6[%c0_33, %c0_34, %c0_35], %52 {strides = array<i32>} : memref<1x8x128xf32, #tpu.memory_space<vmem>>, vector<1x8x128xf32>,
    return
  }
  func.func @transform_0(%arg0: i32) -> (i32, i32, i32) {
    %c0_i32 = arith.constant 0 : i32
    %c0_i32_0 = arith.constant 0 : i32
    %c0_i32_1 = arith.constant 0 : i32
    return %arg0, %c0_i32, %c0_i32_0 : i32, i32, i32
  }
  func.func @transform_1(%arg0: i32) -> (i32, i32, i32) {
    %c0_i32 = arith.constant 0 : i32
    %c0_i32_0 = arith.constant 0 : i32
    %c0_i32_1 = arith.constant 0 : i32
    return %arg0, %c0_i32, %c0_i32_0 : i32, i32, i32
  }
  func.func @transform_2(%arg0: i32) -> (i32, i32, i32) {
    %c0_i32 = arith.constant 0 : i32
    %c0_i32_0 = arith.constant 0 : i32
    %c0_i32_1 = arith.constant 0 : i32
    %c0_i32_2 = arith.constant 0 : i32
    return %c0_i32, %c0_i32_0, %c0_i32_1 : i32, i32, i32
  }
  func.func @transform_3(%arg0: i32) -> (i32, i32) {
    %c0_i32 = arith.constant 0 : i32
    %c0_i32_0 = arith.constant 0 : i32
    %c0_i32_1 = arith.constant 0 : i32
    return %c0_i32, %c0_i32_0 : i32, i32
  }
  func.func @transform_4(%arg0: i32) -> (i32, i32, i32) {
    %c0_i32 = arith.constant 0 : i32
    %c0_i32_0 = arith.constant 0 : i32
    %c0_i32_1 = arith.constant 0 : i32
    return %arg0, %c0_i32, %c0_i32_0 : i32, i32, i32
  }
  func.func @transform_5(%arg0: i32) -> (i32, i32, i32) {
    %c0_i32 = arith.constant 0 : i32
    %c0_i32_0 = arith.constant 0 : i32
    %c0_i32_1 = arith.constant 0 : i32
    return %arg0, %c0_i32, %c0_i32_0 : i32, i32, i32
  }
}

</mosaic_0001>

<llo_original>
// kernel: tpu_custom_call.1
$region0: #{tpu_custom_call.1}
  #allocation0 [shape = 'u32[]', space=smem, size = 0x4, offset = 0x4, fixed_abs, tag = 'smem constant byte address 0x4 - core index']
  #allocation1 [shape = 'u32[144,128]{1,0:T(1,128)}', space=vmem, size = 0x12000, scoped, tag = 'internal scratch']
  %s0 = inlined_call_operand.hbm [shape: bf16[2,16,16], index: 0, kind: input, shape index: {}]
  %s1 = inlined_call_operand.hbm [shape: bf16[2,16,128], index: 1, kind: input, shape index: {}]
  %s2 = inlined_call_operand.hbm [shape: bf16[3,128,128], index: 2, kind: input, shape index: {}]
  %s3 = inlined_call_operand.vmem [shape: f32[8,128], index: 3, kind: input, shape index: {}]
  %s4 = inlined_call_operand.hbm [shape: bf16[2,8,16], index: 4, kind: input, shape index: {}]
  %s5 = inlined_call_operand.hbm [shape: f32[2,8,128], index: 5, kind: output, shape index: {}]
  %s6 = sld [smem:[#allocation0]]
  $region69: #{tpu_custom_call.1} parent=0
    _
  %s8 = ssub.s32 1, %s6
  %s9 = scalar_select 0, %s8, %s6
  $region1: #{tpu_custom_call.1} parent=0
    #allocation2 [shape = 'u8[8192]{0}', space=vmem, size = 0x2000, scoped, tag = 'input window, operand 0']
    #allocation3 [shape = 's32[2]{0}', space=sflag, size = 0x8, scoped, tag = 'scoped memory for tpu_custom_call.1']
    #allocation4 [shape = 's32[2]{0}', space=sflag, size = 0x8, scoped, tag = 'scoped memory for tpu_custom_call.1']
    #allocation5 [shape = 'u8[8192]{0}', space=vmem, size = 0x2000, scoped, tag = 'input window, operand 1']
    #allocation6 [shape = 's32[2]{0}', space=sflag, size = 0x8, scoped, tag = 'scoped memory for tpu_custom_call.1']
    #allocation7 [shape = 'u8[98304]{0}', space=vmem, size = 0x18000, scoped, tag = 'input window, operand 2, single buffered']
    #allocation8 [shape = 'u8[4096]{0}', space=vmem, size = 0x1000, scoped, tag = 'input window, operand 4']
    #allocation9 [shape = 's32[2]{0}', space=sflag, size = 0x8, scoped, tag = 'scoped memory for tpu_custom_call.1']
    #allocation10 [shape = 'u8[8192]{0}', space=vmem, size = 0x2000, scoped, tag = 'output window, operand 0']
    %10 = vsyncpa [#allocation3], 0
    %s11 = scalar_lea.sflag [#allocation3], 1
    %12 = vsyncpa %s11, 0
    %13 = vsyncpa [#allocation6], 0
    %s14 = scalar_lea.sflag [#allocation6], 1
    %15 = vsyncpa %s14, 0
    %16 = vsyncpa [#allocation9], 0
    %s17 = scalar_lea.sflag [#allocation9], 1
    %18 = vsyncpa %s17, 0
    %19 = vsyncpa [#allocation4], 0
    %s20 = scalar_lea.sflag [#allocation4], 1
    %21 = vsyncpa %s20, 0
    loop: start=0, step=1, limit=4
    $region2: #{tpu_custom_call.1} parent=1 // loop_pre_header
      _
    $region3: #{tpu_custom_call.1} parent=1 // loop_header
      %s23 = sphi 0, %s27
      %p24 = scmp.ge.s32.totalorder %s23, 4
      %s33 = sphi 0, %s35
      %s36 = sphi 0, %s33
      %s37 = sphi 0, %s36
      %s53 = sphi 0, %s37
      %s59 = sphi 0, %s61
      %s62 = sphi 0, %s59
      %s63 = sphi 0, %s62
      %s79 = sphi 0, %s63
      %s83 = sphi 0, %s83
      %s85 = sphi 0, %s83
      %s86 = sphi 0, %s85
      %s100 = sphi 0, %s86
      %s104 = sphi 0, %s104
      %s106 = sphi 0, %s104
      %s107 = sphi 0, %s106
      %s121 = sphi 0, %s107
      %s127 = sphi 0, %s129
      %s130 = sphi 0, %s127
      %s131 = sphi 0, %s130
      %s147 = sphi 0, %s131
      %s153 = sphi 0, %s155
      %s156 = sphi 0, %s153
      %s157 = sphi 0, %s156
      %s173 = sphi 0, %s157
    $region4: #{tpu_custom_call.1} parent=1 // loop_header_branch
      %26 = sbr.rel (%p24) target = $region8
    $region5: #{tpu_custom_call.1} parent=1 // loop_body
      %s28 = ssub.s32 %s23, 1
      %s29 = ssub.s32 %s23, 2
      %s30 = sadd.s32 %s23, 1
      %s31 = ssub.s32 %s23, %s30
      %p32 = scmp.eq.s32.totalorder %s31, 0
      %s34 = sadd.s32 %s33, 1
      %s35 = scalar_select %p32, %s33, %s34
      %p38 = pneg %p32
      %p39 = scmp.eq.s32.totalorder %s23, 1
      %p40 = por %p38, %p39
      %p41 = scmp.ne.s32.totalorder %s33, %s36
      %p42 = scmp.eq.s32.totalorder %s23, 0
      %p43 = por %p41, %p42
      %p44 = scmp.ne.s32.totalorder %s33, %s36
      %p45 = scmp.eq.s32.totalorder %s28, 1
      %p46 = por %p44, %p45
      %p47 = scmp.ne.s32.totalorder %s36, %s37
      %p48 = scmp.eq.s32.totalorder %s28, 0
      %p49 = por %p47, %p48
      %p50 = scmp.ne.s32.totalorder %s36, %s37
      %p51 = scmp.eq.s32.totalorder %s29, 1
      %p52 = por %p50, %p51
      %p54 = scmp.ne.s32.totalorder %s37, %s53
      %p55 = scmp.eq.s32.totalorder %s29, 0
      %p56 = por %p54, %p55
      %s57 = ssub.s32 %s23, %s30
      %p58 = scmp.eq.s32.totalorder %s57, 0
      %s60 = sadd.s32 %s59, 1
      %s61 = scalar_select %p58, %s59, %s60
      %p64 = pneg %p58
      %p65 = scmp.eq.s32.totalorder %s23, 1
      %p66 = por %p64, %p65
      %p67 = scmp.ne.s32.totalorder %s59, %s62
      %p68 = scmp.eq.s32.totalorder %s23, 0
      %p69 = por %p67, %p68
      %p70 = scmp.ne.s32.totalorder %s59, %s62
      %p71 = scmp.eq.s32.totalorder %s28, 1
      %p72 = por %p70, %p71
      %p73 = scmp.ne.s32.totalorder %s62, %s63
      %p74 = scmp.eq.s32.totalorder %s28, 0
      %p75 = por %p73, %p74
      %p76 = scmp.ne.s32.totalorder %s62, %s63
      %p77 = scmp.eq.s32.totalorder %s29, 1
      %p78 = por %p76, %p77
      %p80 = scmp.ne.s32.totalorder %s63, %s79
      %p81 = scmp.eq.s32.totalorder %s29, 0
      %p82 = por %p80, %p81
      %s84 = sadd.s32 %s83, 1
      %p87 = scmp.eq.s32.totalorder %s23, 1
      %p88 = scmp.ne.s32.totalorder %s83, %s85
      %p89 = scmp.eq.s32.totalorder %s23, 0
      %p90 = por %p88, %p89
      %p91 = scmp.ne.s32.totalorder %s83, %s85
      %p92 = scmp.eq.s32.totalorder %s28, 1
      %p93 = por %p91, %p92
      %p94 = scmp.ne.s32.totalorder %s85, %s86
      %p95 = scmp.eq.s32.totalorder %s28, 0
      %p96 = por %p94, %p95
      %p97 = scmp.ne.s32.totalorder %s85, %s86
      %p98 = scmp.eq.s32.totalorder %s29, 1
      %p99 = por %p97, %p98
      %p101 = scmp.ne.s32.totalorder %s86, %s100
      %p102 = scmp.eq.s32.totalorder %s29, 0
      %p103 = por %p101, %p102
      %s105 = sadd.s32 %s104, 1
      %p108 = scmp.eq.s32.totalorder %s23, 1
      %p109 = scmp.ne.s32.totalorder %s104, %s106
      %p110 = scmp.eq.s32.totalorder %s23, 0
      %p111 = por %p109, %p110
      %p112 = scmp.ne.s32.totalorder %s104, %s106
      %p113 = scmp.eq.s32.totalorder %s28, 1
      %p114 = por %p112, %p113
      %p115 = scmp.ne.s32.totalorder %s106, %s107
      %p116 = scmp.eq.s32.totalorder %s28, 0
      %p117 = por %p115, %p116
      %p118 = scmp.ne.s32.totalorder %s106, %s107
      %p119 = scmp.eq.s32.totalorder %s29, 1
      %p120 = por %p118, %p119
      %p122 = scmp.ne.s32.totalorder %s107, %s121
      %p123 = scmp.eq.s32.totalorder %s29, 0
      %p124 = por %p122, %p123
      %s125 = ssub.s32 %s23, %s30
      %p126 = scmp.eq.s32.totalorder %s125, 0
      %s128 = sadd.s32 %s127, 1
      %s129 = scalar_select %p126, %s127, %s128
      %p132 = pneg %p126
      %p133 = scmp.eq.s32.totalorder %s23, 1
      %p134 = por %p132, %p133
      %p135 = scmp.ne.s32.totalorder %s127, %s130
      %p136 = scmp.eq.s32.totalorder %s23, 0
      %p137 = por %p135, %p136
      %p138 = scmp.ne.s32.totalorder %s127, %s130
      %p139 = scmp.eq.s32.totalorder %s28, 1
      %p140 = por %p138, %p139
      %p141 = scmp.ne.s32.totalorder %s130, %s131
      %p142 = scmp.eq.s32.totalorder %s28, 0
      %p143 = por %p141, %p142
      %p144 = scmp.ne.s32.totalorder %s130, %s131
      %p145 = scmp.eq.s32.totalorder %s29, 1
      %p146 = por %p144, %p145
      %p148 = scmp.ne.s32.totalorder %s131, %s147
      %p149 = scmp.eq.s32.totalorder %s29, 0
      %p150 = por %p148, %p149
      %s151 = ssub.s32 %s23, %s30
      %p152 = scmp.eq.s32.totalorder %s151, 0
      %s154 = sadd.s32 %s153, 1
      %s155 = scalar_select %p152, %s153, %s154
      %p158 = pneg %p152
      %p159 = scmp.eq.s32.totalorder %s23, 1
      %p160 = por %p158, %p159
      %p161 = scmp.ne.s32.totalorder %s153, %s156
      %p162 = scmp.eq.s32.totalorder %s23, 0
      %p163 = por %p161, %p162
      %p164 = scmp.ne.s32.totalorder %s153, %s156
      %p165 = scmp.eq.s32.totalorder %s28, 1
      %p166 = por %p164, %p165
      %p167 = scmp.ne.s32.totalorder %s156, %s157
      %p168 = scmp.eq.s32.totalorder %s28, 0
      %p169 = por %p167, %p168
      %p170 = scmp.ne.s32.totalorder %s156, %s157
      %p171 = scmp.eq.s32.totalorder %s29, 1
      %p172 = por %p170, %p171
      %p174 = scmp.ne.s32.totalorder %s157, %s173
      %p175 = scmp.eq.s32.totalorder %s29, 0
      %p176 = por %p174, %p175
      %p177 = scmp.le.s32.totalorder 1, %s23
      %p178 = scmp.lt.s32.totalorder %s23, 3
      %p179 = pnand %p177, %p178
      %p180 = pneg %p179
      // Predicated region
      $region9: #{tpu_custom_call.1} parent=5 // pred_check
        _
      $region10: #{tpu_custom_call.1} parent=5 // pred_check_branch
        %182 = sbr.rel (%p179) target = $region12
      $region11: #{tpu_custom_call.1} parent=5 // pred_region
        %s183 = ssub.s32 %s23, 1
        // Predicated region
        $region13: #{tpu_custom_call.1} parent=11 // pred_check
          %p184 = pneg %p96
        $region14: #{tpu_custom_call.1} parent=11 // pred_check_branch
          %186 = sbr.rel (%p184) target = $region16
        $region15: #{tpu_custom_call.1} parent=11 // pred_region
          %s188 = ssub.s32 3072, 3072
          %189 = vsyncadd [#allocation6], %s188
          %s190 = sshll.u32 [#allocation7], 4
          %s191 = int_to_ptr.vmem [resolvable:$true] %s190
          %196 = dma.hbm_to_vmem [thread:$0]  %s2, 3072, %s191, [#allocation6], 64, 64, 4
        $region16: #{tpu_custom_call.1} parent=11 // pred_fallthru
          _
        // Predicated region
        $region17: #{tpu_custom_call.1} parent=11 // pred_check
          %p197 = pneg %p117
        $region18: #{tpu_custom_call.1} parent=11 // pred_check_branch
          %199 = sbr.rel (%p197) target = $region20
        $region19: #{tpu_custom_call.1} parent=11 // pred_region
          _
        $region20: #{tpu_custom_call.1} parent=11 // pred_fallthru
          _
      $region12: #{tpu_custom_call.1} parent=5 // pred_fallthru
        _
      %p200 = scmp.lt.s32.totalorder %s23, 2
      // Predicated region
      $region21: #{tpu_custom_call.1} parent=5 // pred_check
        %p201 = pneg %p200
      $region22: #{tpu_custom_call.1} parent=5 // pred_check_branch
        %203 = sbr.rel (%p201) target = $region24
      $region23: #{tpu_custom_call.1} parent=5 // pred_region
        // Predicated region
        $region25: #{tpu_custom_call.1} parent=23 // pred_check
          %p204 = pneg %p43
        $region26: #{tpu_custom_call.1} parent=23 // pred_check_branch
          %206 = sbr.rel (%p204) target = $region28
        $region27: #{tpu_custom_call.1} parent=23 // pred_region
          %s207 = sand.u32 %s33, 1
          %s208 = scalar_lea.sflag [#allocation3], %s207
          %s209 = sand.u32 %s33, 1
          %s210 = smul.addr %s209, 8
          %s211 = scalar_lea.vmem [#allocation2], %s210
          %s213 = ssub.s32 128, 128
          %214 = vsyncadd %s208, %s213
          %s215 = smul.addr %s23, 2
          %s216 = smul.addr %s215, 64
          %s217 = scalar_lea.hbm %s0, %s216
          %s218 = sshll.u32 %s211, 4
          %s219 = int_to_ptr.vmem [resolvable:$true] %s218
          %224 = dma.hbm_to_vmem [thread:$0]  %s217, 128, %s219, %s208, 64, 64, 4
        $region28: #{tpu_custom_call.1} parent=23 // pred_fallthru
          _
        // Predicated region
        $region29: #{tpu_custom_call.1} parent=23 // pred_check
          %p225 = pneg %p69
        $region30: #{tpu_custom_call.1} parent=23 // pred_check_branch
          %227 = sbr.rel (%p225) target = $region32
        $region31: #{tpu_custom_call.1} parent=23 // pred_region
          %s228 = sand.u32 %s23, 1
          %s229 = scalar_lea.sflag [#allocation6], %s228
          %s230 = sand.u32 %s59, 1
          %s231 = smul.addr %s230, 8
          %s232 = scalar_lea.vmem [#allocation5], %s231
          %s234 = ssub.s32 128, 128
          %235 = vsyncadd %s229, %s234
          %s236 = smul.addr %s23, 2
          %s237 = smul.addr %s236, 64
          %s238 = scalar_lea.hbm %s1, %s237
          %s239 = sshll.u32 %s232, 4
          %s240 = int_to_ptr.vmem [resolvable:$true] %s239
          %245 = dma.hbm_to_vmem [thread:$0]  %s238, 128, %s240, %s229, 64, 64, 4
        $region32: #{tpu_custom_call.1} parent=23 // pred_fallthru
          _
        // Predicated region
        $region33: #{tpu_custom_call.1} parent=23 // pred_check
          %p246 = pneg %p137
        $region34: #{tpu_custom_call.1} parent=23 // pred_check_branch
          %248 = sbr.rel (%p246) target = $region36
        $region35: #{tpu_custom_call.1} parent=23 // pred_region
          %s249 = sand.u32 %s127, 1
          %s250 = scalar_lea.sflag [#allocation9], %s249
          %s251 = sand.u32 %s127, 1
          %s252 = smul.addr %s251, 4
          %s253 = scalar_lea.vmem [#allocation8], %s252
          %s255 = ssub.s32 64, 64
          %256 = vsyncadd %s250, %s255
          %s257 = smul.addr %s23, 64
          %s258 = scalar_lea.hbm %s4, %s257
          %s260 = sshll.u32 %s253, 4
          %s261 = int_to_ptr.vmem [resolvable:$true] %s260
          %263 = dma.hbm_to_vmem [thread:$0]  %s258, 64, %s261, %s250
        $region36: #{tpu_custom_call.1} parent=23 // pred_fallthru
          _
      $region24: #{tpu_custom_call.1} parent=5 // pred_fallthru
        _
      %p264 = scmp.le.s32.totalorder 1, %s23
      %p265 = scmp.lt.s32.totalorder %s23, 3
      %p266 = pnand %p264, %p265
      %p267 = pneg %p266
      // Predicated region
      $region37: #{tpu_custom_call.1} parent=5 // pred_check
        _
      $region38: #{tpu_custom_call.1} parent=5 // pred_check_branch
        %269 = sbr.rel (%p266) target = $region40
      $region39: #{tpu_custom_call.1} parent=5 // pred_region
        %s270 = ssub.s32 %s23, 1
        %s271 = sand.u32 %s36, 1
        %s272 = scalar_lea.sflag [#allocation3], %s271
        %s273 = sand.u32 %s36, 1
        %s274 = smul.addr %s273, 8
        %s275 = scalar_lea.vmem [#allocation2], %s274
        // Predicated region
        $region41: #{tpu_custom_call.1} parent=39 // pred_check
          %p276 = pneg %p49
        $region42: #{tpu_custom_call.1} parent=39 // pred_check_branch
          %278 = sbr.rel (%p276) target = $region44
        $region43: #{tpu_custom_call.1} parent=39 // pred_region
          %279 = dma.done %s272, 128
        $region44: #{tpu_custom_call.1} parent=39 // pred_fallthru
          _
        %s280 = sand.u32 %s28, 1
        %s281 = scalar_lea.sflag [#allocation6], %s280
        %s282 = sand.u32 %s62, 1
        %s283 = smul.addr %s282, 8
        %s284 = scalar_lea.vmem [#allocation5], %s283
        // Predicated region
        $region45: #{tpu_custom_call.1} parent=39 // pred_check
          %p285 = pneg %p75
        $region46: #{tpu_custom_call.1} parent=39 // pred_check_branch
          %287 = sbr.rel (%p285) target = $region48
        $region47: #{tpu_custom_call.1} parent=39 // pred_region
          %288 = dma.done %s281, 128
        $region48: #{tpu_custom_call.1} parent=39 // pred_fallthru
          _
        // Predicated region
        $region49: #{tpu_custom_call.1} parent=39 // pred_check
          %p289 = pneg %p96
        $region50: #{tpu_custom_call.1} parent=39 // pred_check_branch
          %291 = sbr.rel (%p289) target = $region52
        $region51: #{tpu_custom_call.1} parent=39 // pred_region
          %292 = dma.done [#allocation6], 3072
        $region52: #{tpu_custom_call.1} parent=39 // pred_fallthru
          _
        %s293 = sand.u32 %s130, 1
        %s294 = scalar_lea.sflag [#allocation9], %s293
        %s295 = sand.u32 %s130, 1
        %s296 = smul.addr %s295, 4
        %s297 = scalar_lea.vmem [#allocation8], %s296
        // Predicated region
        $region53: #{tpu_custom_call.1} parent=39 // pred_check
          %p298 = pneg %p143
        $region54: #{tpu_custom_call.1} parent=39 // pred_check_branch
          %300 = sbr.rel (%p298) target = $region56
        $region55: #{tpu_custom_call.1} parent=39 // pred_region
          %301 = dma.done %s294, 64
        $region56: #{tpu_custom_call.1} parent=39 // pred_fallthru
          _
        %s302 = sand.u32 %s36, 1
        %s303 = scalar_lea.sflag [#allocation3], %s302
        %s304 = sand.u32 %s36, 1
        %s305 = smul.addr %s304, 8
        %s306 = scalar_lea.vmem [#allocation2], %s305
        %p307 = pneg %p49
        %p308 = pneg %p46
        %s309 = sand.u32 %s28, 1
        %s310 = scalar_lea.sflag [#allocation6], %s309
        %s311 = sand.u32 %s62, 1
        %s312 = smul.addr %s311, 8
        %s313 = scalar_lea.vmem [#allocation5], %s312
        %p314 = pneg %p75
        %p315 = pneg %p72
        %p316 = pneg %p96
        %p317 = pneg %p93
        %p318 = pneg %p117
        %p319 = pneg %p114
        %s320 = sand.u32 %s130, 1
        %s321 = scalar_lea.sflag [#allocation9], %s320
        %s322 = sand.u32 %s130, 1
        %s323 = smul.addr %s322, 4
        %s324 = scalar_lea.vmem [#allocation8], %s323
        %p325 = pneg %p143
        %p326 = pneg %p140
        %p327 = pneg %p169
        %p328 = pneg %p166
        %s329 = sand.u32 %s156, 1
        %s330 = scalar_lea.sflag [#allocation4], %s329
        %s331 = sand.u32 %s156, 1
        %s332 = smul.addr %s331, 8
        %s333 = scalar_lea.vmem [#allocation10], %s332
        %v335 = vld [vmem:[%s275] sm:$0xf]
        %v336 = vld [vmem:[%s275 + $0x4] sm:$0xf]
        %v337 = vld [vmem:[%s284] sm:$0xf]
        %v338 = vld [vmem:[%s284 + $0x4] sm:$0xf]
        %v339 = vld [vmem:[#allocation7] sm:$0xf]
        %v340 = vld [vmem:[#allocation7 + $0x4] sm:$0xf]
        %v341 = vld [vmem:[#allocation7 + $0x8] sm:$0xf]
        %v342 = vld [vmem:[#allocation7 + $0xc] sm:$0xf]
        %v343 = vld [vmem:[#allocation7 + $0x10] sm:$0xf]
        %v344 = vld [vmem:[#allocation7 + $0x14] sm:$0xf]
        %v345 = vld [vmem:[#allocation7 + $0x18] sm:$0xf]
        %v346 = vld [vmem:[#allocation7 + $0x1c] sm:$0xf]
        %v347 = vld [vmem:[#allocation7 + $0x20] sm:$0xf]
        %v348 = vld [vmem:[#allocation7 + $0x24] sm:$0xf]
        %v349 = vld [vmem:[#allocation7 + $0x28] sm:$0xf]
        %v350 = vld [vmem:[#allocation7 + $0x2c] sm:$0xf]
        %v351 = vld [vmem:[#allocation7 + $0x30] sm:$0xf]
        %v352 = vld [vmem:[#allocation7 + $0x34] sm:$0xf]
        %v353 = vld [vmem:[#allocation7 + $0x38] sm:$0xf]
        %v354 = vld [vmem:[#allocation7 + $0x3c] sm:$0xf]
        %v357 = vunpack.c.l.b16 %v337
        %v358 = vunpack.c.l.b16 %v338
        %v359 = vpack.c.b16 %v358, %v357
        %v377 = vunpack.c.l.b16 %v339
        %v378 = vunpack.c.l.b16 %v340
        %v379 = vunpack.c.l.b16 %v341
        %v380 = vunpack.c.l.b16 %v342
        %v381 = vunpack.c.l.b16 %v343
        %v382 = vunpack.c.l.b16 %v344
        %v383 = vunpack.c.l.b16 %v345
        %v384 = vunpack.c.l.b16 %v346
        %v385 = vunpack.c.l.b16 %v347
        %v386 = vunpack.c.l.b16 %v348
        %v387 = vunpack.c.l.b16 %v349
        %v388 = vunpack.c.l.b16 %v350
        %v389 = vunpack.c.l.b16 %v351
        %v390 = vunpack.c.l.b16 %v352
        %v391 = vunpack.c.l.b16 %v353
        %v392 = vunpack.c.l.b16 %v354
        %v393 = vpack.c.b16 %v378, %v377
        %v394 = vpack.c.b16 %v380, %v379
        %v395 = vpack.c.b16 %v382, %v381
        %v396 = vpack.c.b16 %v384, %v383
        %v397 = vpack.c.b16 %v386, %v385
        %v398 = vpack.c.b16 %v388, %v387
        %v399 = vpack.c.b16 %v390, %v389
        %v400 = vpack.c.b16 %v392, %v391
        %409 = vmatprep.subr.bf16.mxu0 0
        %410 = vmatpush1.bf16.msra.mxu0 %v393
        %411 = vmatprep.subr.bf16.mxu0 0
        %412 = vmatpush1.bf16.msra.mxu0 %v394
        %413 = vmatprep.subr.bf16.mxu0 0
        %414 = vmatpush1.bf16.msra.mxu0 %v395
        %415 = vmatprep.subr.bf16.mxu0 0
        %416 = vmatpush1.bf16.msra.mxu0 %v396
        %417 = vmatprep.subr.bf16.mxu0 0
        %418 = vmatpush1.bf16.msra.mxu0 %v397
        %419 = vmatprep.subr.bf16.mxu0 0
        %420 = vmatpush1.bf16.msra.mxu0 %v398
        %421 = vmatprep.subr.bf16.mxu0 0
        %422 = vmatpush1.bf16.msra.mxu0 %v399
        %423 = vmatprep.subr.bf16.mxu0 0
        %424 = vmatpush1.bf16.msra.mxu0 %v400
        %425 = vmatprep.subr.bf16.mxu0 0
        %426 = vmatpush1.bf16.msra.mxu0 0
        %427 = vmatprep.subr.bf16.mxu0 0
        %428 = vmatpush1.bf16.msra.mxu0 0
        %429 = vmatprep.subr.bf16.mxu0 0
        %430 = vmatpush1.bf16.msra.mxu0 0
        %431 = vmatprep.subr.bf16.mxu0 0
        %432 = vmatpush1.bf16.msra.mxu0 0
        %433 = vmatprep.subr.bf16.mxu0 0
        %434 = vmatpush1.bf16.msra.mxu0 0
        %435 = vmatprep.subr.bf16.mxu0 0
        %436 = vmatpush1.bf16.msra.mxu0 0
        %437 = vmatprep.subr.bf16.mxu0 0
        %438 = vmatpush1.bf16.msra.mxu0 0
        %439 = vmatprep.subr.bf16.mxu0 0
        %440 = vmatpush1.bf16.msra.mxu0 0
        %441 = vmatprep.mubr.bf16.mxu0 0
        %442 = vmatmul.mubr.bf16.gmra.mrb[0].mxu0 %v359
        %v443 = vpop.f32.mrb[0].mxu0
        %v444 = vadd.f32 0.0, %v443
        %v445 = vpop.f32.mrb[0].mxu0
        %v446 = vpop.f32.mrb[0].mxu0
        %v447 = vadd.f32 0.0, %v446
        %v448 = vpop.f32.mrb[0].mxu0
        %449 = vdwg.mxu0
        %v450 = vpack.c.bf16 %v447, %v444
        %v451 = vld [vmem:[%s3] sm:$0x1]
        %v452 = vlaneseq
        %v453 = vshrl.u32 %v452, 7
        %v454 = vsub.s32 0, %v453
        %v455 = vrot.slane %v451, %v454
        %v458 = vunpack.c.l.b16 %v335
        %v459 = vunpack.c.l.b16 %v336
        %v460 = vpack.c.b16 %v459, %v458
        %vm461 = vcmask 130048
        %v463 = vsel %vm461, %v460, 0
        %465 = vmatprep.subr.bf16.mxu0 0
        %466 = vmatpush1.bf16.msra.mxu0 %v450
        %467 = vmatprep.subr.bf16.mxu0 0
        %468 = vmatpush1.bf16.msra.mxu0 0
        %469 = vmatprep.subr.bf16.mxu0 0
        %470 = vmatpush1.bf16.msra.mxu0 0
        %471 = vmatprep.subr.bf16.mxu0 0
        %472 = vmatpush1.bf16.msra.mxu0 0
        %473 = vmatprep.subr.bf16.mxu0 0
        %474 = vmatpush1.bf16.msra.mxu0 0
        %475 = vmatprep.subr.bf16.mxu0 0
        %476 = vmatpush1.bf16.msra.mxu0 0
        %477 = vmatprep.subr.bf16.mxu0 0
        %478 = vmatpush1.bf16.msra.mxu0 0
        %479 = vmatprep.subr.bf16.mxu0 0
        %480 = vmatpush1.bf16.msra.mxu0 0
        %481 = vmatprep.subr.bf16.mxu0 0
        %482 = vmatpush1.bf16.msra.mxu0 0
        %483 = vmatprep.subr.bf16.mxu0 0
        %484 = vmatpush1.bf16.msra.mxu0 0
        %485 = vmatprep.subr.bf16.mxu0 0
        %486 = vmatpush1.bf16.msra.mxu0 0
        %487 = vmatprep.subr.bf16.mxu0 0
        %488 = vmatpush1.bf16.msra.mxu0 0
        %489 = vmatprep.subr.bf16.mxu0 0
        %490 = vmatpush1.bf16.msra.mxu0 0
        %491 = vmatprep.subr.bf16.mxu0 0
        %492 = vmatpush1.bf16.msra.mxu0 0
        %493 = vmatprep.subr.bf16.mxu0 0
        %494 = vmatpush1.bf16.msra.mxu0 0
        %495 = vmatprep.subr.bf16.mxu0 0
        %496 = vmatpush1.bf16.msra.mxu0 0
        %497 = vmatprep.mubr.bf16.mxu0 0
        %498 = vmatmul.mubr.bf16.gmra.mrb[0].mxu0 %v463
        %v499 = vpop.f32.mrb[0].mxu0
        %v500 = vadd.f32 %v455, %v499
        %v501 = vpop.f32.mrb[0].mxu0
        %v502 = vpop.f32.mrb[0].mxu0
        %v503 = vadd.f32 %v455, %v502
        %v504 = vpop.f32.mrb[0].mxu0
        %505 = vdwg.mxu0
        %v506 = vmax.f32 %v500, 0.0
        %v507 = vmax.f32 %v503, 0.0
        %v508 = vpack.c.bf16 %v507, %v506
        %s509 = scalar_lea.vmem [#allocation7], 64
        %v510 = vld [vmem:[%s509] sm:$0xf]
        %v511 = vld [vmem:[%s509 + $0x4] sm:$0xf]
        %v512 = vld [vmem:[%s509 + $0x8] sm:$0xf]
        %v513 = vld [vmem:[%s509 + $0xc] sm:$0xf]
        %v514 = vld [vmem:[%s509 + $0x10] sm:$0xf]
        %v515 = vld [vmem:[%s509 + $0x14] sm:$0xf]
        %v516 = vld [vmem:[%s509 + $0x18] sm:$0xf]
        %v517 = vld [vmem:[%s509 + $0x1c] sm:$0xf]
        %v518 = vld [vmem:[%s509 + $0x20] sm:$0xf]
        %v519 = vld [vmem:[%s509 + $0x24] sm:$0xf]
        %v520 = vld [vmem:[%s509 + $0x28] sm:$0xf]
        %v521 = vld [vmem:[%s509 + $0x2c] sm:$0xf]
        %v522 = vld [vmem:[%s509 + $0x30] sm:$0xf]
        %v523 = vld [vmem:[%s509 + $0x34] sm:$0xf]
        %v524 = vld [vmem:[%s509 + $0x38] sm:$0xf]
        %v525 = vld [vmem:[%s509 + $0x3c] sm:$0xf]
        %v542 = vunpack.c.l.b16 %v510
        %v543 = vunpack.c.l.b16 %v511
        %v544 = vunpack.c.l.b16 %v512
        %v545 = vunpack.c.l.b16 %v513
        %v546 = vunpack.c.l.b16 %v514
        %v547 = vunpack.c.l.b16 %v515
        %v548 = vunpack.c.l.b16 %v516
        %v549 = vunpack.c.l.b16 %v517
        %v550 = vunpack.c.l.b16 %v518
        %v551 = vunpack.c.l.b16 %v519
        %v552 = vunpack.c.l.b16 %v520
        %v553 = vunpack.c.l.b16 %v521
        %v554 = vunpack.c.l.b16 %v522
        %v555 = vunpack.c.l.b16 %v523
        %v556 = vunpack.c.l.b16 %v524
        %v557 = vunpack.c.l.b16 %v525
        %v558 = vpack.c.b16 %v543, %v542
        %v559 = vpack.c.b16 %v545, %v544
        %v560 = vpack.c.b16 %v547, %v546
        %v561 = vpack.c.b16 %v549, %v548
        %v562 = vpack.c.b16 %v551, %v550
        %v563 = vpack.c.b16 %v553, %v552
        %v564 = vpack.c.b16 %v555, %v554
        %v565 = vpack.c.b16 %v557, %v556
        %574 = vmatprep.subr.bf16.mxu0 0
        %575 = vmatpush1.bf16.msra.mxu0 %v558
        %576 = vmatprep.subr.bf16.mxu0 0
        %577 = vmatpush1.bf16.msra.mxu0 %v559
        %578 = vmatprep.subr.bf16.mxu0 0
        %579 = vmatpush1.bf16.msra.mxu0 %v560
        %580 = vmatprep.subr.bf16.mxu0 0
        %581 = vmatpush1.bf16.msra.mxu0 %v561
        %582 = vmatprep.subr.bf16.mxu0 0
        %583 = vmatpush1.bf16.msra.mxu0 %v562
        %584 = vmatprep.subr.bf16.mxu0 0
        %585 = vmatpush1.bf16.msra.mxu0 %v563
        %586 = vmatprep.subr.bf16.mxu0 0
        %587 = vmatpush1.bf16.msra.mxu0 %v564
        %588 = vmatprep.subr.bf16.mxu0 0
        %589 = vmatpush1.bf16.msra.mxu0 %v565
        %590 = vmatprep.subr.bf16.mxu0 0
        %591 = vmatpush1.bf16.msra.mxu0 0
        %592 = vmatprep.subr.bf16.mxu0 0
        %593 = vmatpush1.bf16.msra.mxu0 0
        %594 = vmatprep.subr.bf16.mxu0 0
        %595 = vmatpush1.bf16.msra.mxu0 0
        %596 = vmatprep.subr.bf16.mxu0 0
        %597 = vmatpush1.bf16.msra.mxu0 0
        %598 = vmatprep.subr.bf16.mxu0 0
        %599 = vmatpush1.bf16.msra.mxu0 0
        %600 = vmatprep.subr.bf16.mxu0 0
        %601 = vmatpush1.bf16.msra.mxu0 0
        %602 = vmatprep.subr.bf16.mxu0 0
        %603 = vmatpush1.bf16.msra.mxu0 0
        %604 = vmatprep.subr.bf16.mxu0 0
        %605 = vmatpush1.bf16.msra.mxu0 0
        %606 = vmatprep.mubr.bf16.mxu0 0
        %607 = vmatmul.mubr.bf16.gmra.mrb[0].mxu0 %v508
        %v608 = vpop.f32.mrb[0].mxu0
        %v609 = vadd.f32 0.0, %v608
        %v610 = vpop.f32.mrb[0].mxu0
        %v611 = vpop.f32.mrb[0].mxu0
        %v612 = vadd.f32 0.0, %v611
        %v613 = vpop.f32.mrb[0].mxu0
        %614 = vdwg.mxu0
        %v615 = vpack.c.bf16 %v612, %v609
        %v616 = vld [vmem:[%s3 + $0x1] sm:$0x1]
        %v617 = vlaneseq
        %v618 = vshrl.u32 %v617, 7
        %v619 = vsub.s32 0, %v618
        %v620 = vrot.slane %v616, %v619
        %621 = vmatprep.subr.bf16.mxu0 0
        %622 = vmatpush1.bf16.msra.mxu0 %v615
        %623 = vmatprep.subr.bf16.mxu0 0
        %624 = vmatpush1.bf16.msra.mxu0 0
        %625 = vmatprep.subr.bf16.mxu0 0
        %626 = vmatpush1.bf16.msra.mxu0 0
        %627 = vmatprep.subr.bf16.mxu0 0
        %628 = vmatpush1.bf16.msra.mxu0 0
        %629 = vmatprep.subr.bf16.mxu0 0
        %630 = vmatpush1.bf16.msra.mxu0 0
        %631 = vmatprep.subr.bf16.mxu0 0
        %632 = vmatpush1.bf16.msra.mxu0 0
        %633 = vmatprep.subr.bf16.mxu0 0
        %634 = vmatpush1.bf16.msra.mxu0 0
        %635 = vmatprep.subr.bf16.mxu0 0
        %636 = vmatpush1.bf16.msra.mxu0 0
        %637 = vmatprep.subr.bf16.mxu0 0
        %638 = vmatpush1.bf16.msra.mxu0 0
        %639 = vmatprep.subr.bf16.mxu0 0
        %640 = vmatpush1.bf16.msra.mxu0 0
        %641 = vmatprep.subr.bf16.mxu0 0
        %642 = vmatpush1.bf16.msra.mxu0 0
        %643 = vmatprep.subr.bf16.mxu0 0
        %644 = vmatpush1.bf16.msra.mxu0 0
        %645 = vmatprep.subr.bf16.mxu0 0
        %646 = vmatpush1.bf16.msra.mxu0 0
        %647 = vmatprep.subr.bf16.mxu0 0
        %648 = vmatpush1.bf16.msra.mxu0 0
        %649 = vmatprep.subr.bf16.mxu0 0
        %650 = vmatpush1.bf16.msra.mxu0 0
        %651 = vmatprep.subr.bf16.mxu0 0
        %652 = vmatpush1.bf16.msra.mxu0 0
        %653 = vmatprep.mubr.bf16.mxu0 0
        %654 = vmatmul.mubr.bf16.gmra.mrb[0].mxu0 %v463
        %v655 = vpop.f32.mrb[0].mxu0
        %v656 = vadd.f32 %v620, %v655
        %v657 = vpop.f32.mrb[0].mxu0
        %v658 = vpop.f32.mrb[0].mxu0
        %v659 = vadd.f32 %v620, %v658
        %v660 = vpop.f32.mrb[0].mxu0
        %661 = vdwg.mxu0
        %v662 = vmax.f32 %v656, 0.0
        %v663 = vmax.f32 %v659, 0.0
        %v664 = vpack.c.bf16 %v663, %v662
        %s665 = scalar_lea.vmem [#allocation7], 128
        %v666 = vld [vmem:[%s665] sm:$0xf]
        %v667 = vld [vmem:[%s665 + $0x4] sm:$0xf]
        %v668 = vld [vmem:[%s665 + $0x8] sm:$0xf]
        %v669 = vld [vmem:[%s665 + $0xc] sm:$0xf]
        %v670 = vld [vmem:[%s665 + $0x10] sm:$0xf]
        %v671 = vld [vmem:[%s665 + $0x14] sm:$0xf]
        %v672 = vld [vmem:[%s665 + $0x18] sm:$0xf]
        %v673 = vld [vmem:[%s665 + $0x1c] sm:$0xf]
        %v674 = vld [vmem:[%s665 + $0x20] sm:$0xf]
        %v675 = vld [vmem:[%s665 + $0x24] sm:$0xf]
        %v676 = vld [vmem:[%s665 + $0x28] sm:$0xf]
        %v677 = vld [vmem:[%s665 + $0x2c] sm:$0xf]
        %v678 = vld [vmem:[%s665 + $0x30] sm:$0xf]
        %v679 = vld [vmem:[%s665 + $0x34] sm:$0xf]
        %v680 = vld [vmem:[%s665 + $0x38] sm:$0xf]
        %v681 = vld [vmem:[%s665 + $0x3c] sm:$0xf]
        %v698 = vunpack.c.l.b16 %v666
        %v699 = vunpack.c.l.b16 %v667
        %v700 = vunpack.c.l.b16 %v668
        %v701 = vunpack.c.l.b16 %v669
        %v702 = vunpack.c.l.b16 %v670
        %v703 = vunpack.c.l.b16 %v671
        %v704 = vunpack.c.l.b16 %v672
        %v705 = vunpack.c.l.b16 %v673
        %v706 = vunpack.c.l.b16 %v674
        %v707 = vunpack.c.l.b16 %v675
        %v708 = vunpack.c.l.b16 %v676
        %v709 = vunpack.c.l.b16 %v677
        %v710 = vunpack.c.l.b16 %v678
        %v711 = vunpack.c.l.b16 %v679
        %v712 = vunpack.c.l.b16 %v680
        %v713 = vunpack.c.l.b16 %v681
        %v714 = vpack.c.b16 %v699, %v698
        %v715 = vpack.c.b16 %v701, %v700
        %v716 = vpack.c.b16 %v703, %v702
        %v717 = vpack.c.b16 %v705, %v704
        %v718 = vpack.c.b16 %v707, %v706
        %v719 = vpack.c.b16 %v709, %v708
        %v720 = vpack.c.b16 %v711, %v710
        %v721 = vpack.c.b16 %v713, %v712
        %730 = vmatprep.subr.bf16.mxu0 0
        %731 = vmatpush1.bf16.msra.mxu0 %v714
        %732 = vmatprep.subr.bf16.mxu0 0
        %733 = vmatpush1.bf16.msra.mxu0 %v715
        %734 = vmatprep.subr.bf16.mxu0 0
        %735 = vmatpush1.bf16.msra.mxu0 %v716
        %736 = vmatprep.subr.bf16.mxu0 0
        %737 = vmatpush1.bf16.msra.mxu0 %v717
        %738 = vmatprep.subr.bf16.mxu0 0
        %739 = vmatpush1.bf16.msra.mxu0 %v718
        %740 = vmatprep.subr.bf16.mxu0 0
        %741 = vmatpush1.bf16.msra.mxu0 %v719
        %742 = vmatprep.subr.bf16.mxu0 0
        %743 = vmatpush1.bf16.msra.mxu0 %v720
        %744 = vmatprep.subr.bf16.mxu0 0
        %745 = vmatpush1.bf16.msra.mxu0 %v721
        %746 = vmatprep.subr.bf16.mxu0 0
        %747 = vmatpush1.bf16.msra.mxu0 0
        %748 = vmatprep.subr.bf16.mxu0 0
        %749 = vmatpush1.bf16.msra.mxu0 0
        %750 = vmatprep.subr.bf16.mxu0 0
        %751 = vmatpush1.bf16.msra.mxu0 0
        %752 = vmatprep.subr.bf16.mxu0 0
        %753 = vmatpush1.bf16.msra.mxu0 0
        %754 = vmatprep.subr.bf16.mxu0 0
        %755 = vmatpush1.bf16.msra.mxu0 0
        %756 = vmatprep.subr.bf16.mxu0 0
        %757 = vmatpush1.bf16.msra.mxu0 0
        %758 = vmatprep.subr.bf16.mxu0 0
        %759 = vmatpush1.bf16.msra.mxu0 0
        %760 = vmatprep.subr.bf16.mxu0 0
        %761 = vmatpush1.bf16.msra.mxu0 0
        %762 = vmatprep.mubr.bf16.mxu0 0
        %763 = vmatmul.mubr.bf16.gmra.mrb[0].mxu0 %v664
        %v764 = vpop.f32.mrb[0].mxu0
        %v765 = vadd.f32 0.0, %v764
        %v766 = vpop.f32.mrb[0].mxu0
        %v767 = vpop.f32.mrb[0].mxu0
        %v768 = vadd.f32 0.0, %v767
        %v769 = vpop.f32.mrb[0].mxu0
        %770 = vdwg.mxu0
        %v771 = vpack.c.bf16 %v768, %v765
        %v772 = vld [vmem:[%s3 + $0x2] sm:$0x1]
        %v773 = vlaneseq
        %v774 = vshrl.u32 %v773, 7
        %v775 = vsub.s32 0, %v774
        %v776 = vrot.slane %v772, %v775
        %777 = vmatprep.subr.bf16.mxu0 0
        %778 = vmatpush1.bf16.msra.mxu0 %v771
        %779 = vmatprep.subr.bf16.mxu0 0
        %780 = vmatpush1.bf16.msra.mxu0 0
        %781 = vmatprep.subr.bf16.mxu0 0
        %782 = vmatpush1.bf16.msra.mxu0 0
        %783 = vmatprep.subr.bf16.mxu0 0
        %784 = vmatpush1.bf16.msra.mxu0 0
        %785 = vmatprep.subr.bf16.mxu0 0
        %786 = vmatpush1.bf16.msra.mxu0 0
        %787 = vmatprep.subr.bf16.mxu0 0
        %788 = vmatpush1.bf16.msra.mxu0 0
        %789 = vmatprep.subr.bf16.mxu0 0
        %790 = vmatpush1.bf16.msra.mxu0 0
        %791 = vmatprep.subr.bf16.mxu0 0
        %792 = vmatpush1.bf16.msra.mxu0 0
        %793 = vmatprep.subr.bf16.mxu0 0
        %794 = vmatpush1.bf16.msra.mxu0 0
        %795 = vmatprep.subr.bf16.mxu0 0
        %796 = vmatpush1.bf16.msra.mxu0 0
        %797 = vmatprep.subr.bf16.mxu0 0
        %798 = vmatpush1.bf16.msra.mxu0 0
        %799 = vmatprep.subr.bf16.mxu0 0
        %800 = vmatpush1.bf16.msra.mxu0 0
        %801 = vmatprep.subr.bf16.mxu0 0
        %802 = vmatpush1.bf16.msra.mxu0 0
        %803 = vmatprep.subr.bf16.mxu0 0
        %804 = vmatpush1.bf16.msra.mxu0 0
        %805 = vmatprep.subr.bf16.mxu0 0
        %806 = vmatpush1.bf16.msra.mxu0 0
        %807 = vmatprep.subr.bf16.mxu0 0
        %808 = vmatpush1.bf16.msra.mxu0 0
        %809 = vmatprep.mubr.bf16.mxu0 0
        %810 = vmatmul.mubr.bf16.gmra.mrb[0].mxu0 %v463
        %v811 = vpop.f32.mrb[0].mxu0
        %v812 = vadd.f32 %v776, %v811
        %v813 = vpop.f32.mrb[0].mxu0
        %v814 = vpop.f32.mrb[0].mxu0
        %v815 = vadd.f32 %v776, %v814
        %v816 = vpop.f32.mrb[0].mxu0
        %817 = vdwg.mxu0
        %v818 = vmax.f32 %v812, 0.0
        %v819 = vmax.f32 %v815, 0.0
        %v820 = vld [vmem:[%s297] sm:$0xf]
        %v821 = vpack.c.bf16 %v819, %v818
        %v823 = vsel %vm461, %v820, 0
        %825 = vmatprep.subr.bf16.mxu0 0
        %826 = vmatpush1.bf16.msra.mxu0 %v821
        %827 = vmatprep.subr.bf16.mxu0 0
        %828 = vmatpush1.bf16.msra.mxu0 0
        %829 = vmatprep.subr.bf16.mxu0 0
        %830 = vmatpush1.bf16.msra.mxu0 0
        %831 = vmatprep.subr.bf16.mxu0 0
        %832 = vmatpush1.bf16.msra.mxu0 0
        %833 = vmatprep.subr.bf16.mxu0 0
        %834 = vmatpush1.bf16.msra.mxu0 0
        %835 = vmatprep.subr.bf16.mxu0 0
        %836 = vmatpush1.bf16.msra.mxu0 0
        %837 = vmatprep.subr.bf16.mxu0 0
        %838 = vmatpush1.bf16.msra.mxu0 0
        %839 = vmatprep.subr.bf16.mxu0 0
        %840 = vmatpush1.bf16.msra.mxu0 0
        %841 = vmatprep.subr.bf16.mxu0 0
        %842 = vmatpush1.bf16.msra.mxu0 0
        %843 = vmatprep.subr.bf16.mxu0 0
        %844 = vmatpush1.bf16.msra.mxu0 0
        %845 = vmatprep.subr.bf16.mxu0 0
        %846 = vmatpush1.bf16.msra.mxu0 0
        %847 = vmatprep.subr.bf16.mxu0 0
        %848 = vmatpush1.bf16.msra.mxu0 0
        %849 = vmatprep.subr.bf16.mxu0 0
        %850 = vmatpush1.bf16.msra.mxu0 0
        %851 = vmatprep.subr.bf16.mxu0 0
        %852 = vmatpush1.bf16.msra.mxu0 0
        %853 = vmatprep.subr.bf16.mxu0 0
        %854 = vmatpush1.bf16.msra.mxu0 0
        %855 = vmatprep.subr.bf16.mxu0 0
        %856 = vmatpush1.bf16.msra.mxu0 0
        %857 = vmatprep.mubr.bf16.mxu0 0
        %858 = vmatmul.mubr.bf16.gmra.mrb[0].mxu0 %v823
        %v859 = vpop.f32.mrb[0].mxu0
        %v860 = vadd.f32 0.0, %v859
        %v861 = vpop.f32.mrb[0].mxu0
        %v862 = vpop.f32.mrb[0].mxu0
        %v863 = vpop.f32.mrb[0].mxu0
        %864 = vdwg.mxu0
        %v865 = vld [vmem:[%s3 + $0x3] sm:$0x1]
        %v866 = vlaneseq
        %v867 = vshrl.u32 %v866, 7
        %v868 = vsub.s32 0, %v867
        %v869 = vrot.slane %v865, %v868
        %v870 = vmul.f32 %v860, %v869
        %871 = vadd.xlane.f32.xlu0 %v870
        %v872 = vpop.xlane.xlu0 %871
        %v873 = vld [vmem:[%s3 + $0x4] sm:$0x1]
        %v874 = vlaneseq
        %v875 = vshrl.u32 %v874, 7
        %v876 = vsub.s32 0, %v875
        %v877 = vrot.slane %v873, %v876
        %v878 = vadd.f32 %v872, %v877
        %879 = vst [vmem:[%s333] sm:$0xff] %v878
        %s880 = sand.u32 %s156, 1
        %s881 = scalar_lea.sflag [#allocation4], %s880
        %s882 = sand.u32 %s156, 1
        %s883 = smul.addr %s882, 8
        %s884 = scalar_lea.vmem [#allocation10], %s883
        // Predicated region
        $region57: #{tpu_custom_call.1} parent=39 // pred_check
          %p885 = pneg %p166
        $region58: #{tpu_custom_call.1} parent=39 // pred_check_branch
          %887 = sbr.rel (%p885) target = $region60
        $region59: #{tpu_custom_call.1} parent=39 // pred_region
          %s889 = ssub.s32 128, 128
          %890 = vsyncadd %s881, %s889
          %s891 = smul.addr %s28, 128
          %s892 = scalar_lea.hbm %s5, %s891
          %s894 = sshll.u32 %s884, 4
          %s895 = int_to_ptr.vmem [resolvable:$true] %s894
          %897 = dma.vmem_to_hbm [thread:$0]  %s895, 128, %s892, %s881
        $region60: #{tpu_custom_call.1} parent=39 // pred_fallthru
          _
      $region40: #{tpu_custom_call.1} parent=5 // pred_fallthru
        _
      %p898 = scmp.le.s32.totalorder 2, %s23
      // Predicated region
      $region61: #{tpu_custom_call.1} parent=5 // pred_check
        %p899 = pneg %p898
      $region62: #{tpu_custom_call.1} parent=5 // pred_check_branch
        %901 = sbr.rel (%p899) target = $region64
      $region63: #{tpu_custom_call.1} parent=5 // pred_region
        %s902 = ssub.s32 %s23, 2
        // Predicated region
        $region65: #{tpu_custom_call.1} parent=63 // pred_check
          %p903 = pneg %p172
        $region66: #{tpu_custom_call.1} parent=63 // pred_check_branch
          %905 = sbr.rel (%p903) target = $region68
        $region67: #{tpu_custom_call.1} parent=63 // pred_region
          %s906 = sand.u32 %s157, 1
          %s907 = scalar_lea.sflag [#allocation4], %s906
          %s908 = sand.u32 %s157, 1
          %s909 = smul.addr %s908, 8
          %s910 = scalar_lea.vmem [#allocation10], %s909
          %911 = dma.done %s907, 128
        $region68: #{tpu_custom_call.1} parent=63 // pred_fallthru
          _
      $region64: #{tpu_custom_call.1} parent=5 // pred_fallthru
        _
    $region6: #{tpu_custom_call.1} parent=1 // loop_footer
      %s27 = sadd.s32 1, %s23
    $region7: #{tpu_custom_call.1} parent=1 // loop_footer_branch
      %22 = sbr.rel target = $region3
    $region8: #{tpu_custom_call.1} parent=1 // loop_exit
      _
    %912 = vsyncpa [#allocation3], 1
    %s913 = scalar_lea.sflag [#allocation3], 1
    %914 = vsyncpa %s913, 1
    %915 = vsyncpa [#allocation6], 1
    %s916 = scalar_lea.sflag [#allocation6], 1
    %917 = vsyncpa %s916, 1
    %918 = vsyncpa [#allocation9], 1
    %s919 = scalar_lea.sflag [#allocation9], 1
    %920 = vsyncpa %s919, 1
    %921 = vsyncpa [#allocation4], 1
    %s922 = scalar_lea.sflag [#allocation4], 1
    %923 = vsyncpa %s922, 1

</llo_original>
